<compile_context>
chip_gen: v5e
topology: v5e:2x2
jax: 0.10.0
libtpu: 0.0.40
codegen_flags: <defaults>
</compile_context>

<pallas_src>
import jax
import jax.numpy as jnp
from jax import lax
from jax.experimental import pallas as pl
from jax.experimental.pallas import tpu as pltpu


def myconv1d_forward(x, w1, b1, w2, b2):
    """x: (N, C, L) float32 (PyTorch NCL). Returns (N, C, (L+3)//2)."""
    N, C, L = x.shape
    O1 = w1.shape[0]                 # 256
    Lpool = (L + 3) // 2
    T = 2 * Lpool                    # even-length pool input (last y2 row of an
                                     # even-L sequence is dropped by MaxPool anyway)

    # ---- VMEM-budget-driven tile sizing (review items 1/2/3/10/11/12) ----
    try:
        info = pltpu.get_tpu_info()
        vmem_cap = int(getattr(info, "vmem_capacity_bytes", 64 * 1024 * 1024))
    except Exception:
        vmem_cap = 64 * 1024 * 1024                      # safe on v5e/v6e/v7x
    vmem_limit = int(min(vmem_cap * 3 // 4, 96 * 1024 * 1024))

    # dominant f32 working set per matmul row: G (3*O1) + h1 (O1) + small slabs
    bytes_per_row = 4 * (3 * O1 + O1 + 4 * 128)
    max_rows = max(L, (vmem_limit // 2) // bytes_per_row)
    target_rows = min(2048, max_rows)                    # amortize ~0.35us/step
    bb = max(1, target_rows // max(L, 1))
    if N >= 2:
        bb = min(bb, N // 2)         # grid >= 2 so both v7x TensorCores get work
    bb = max(bb, 1)
    nb = pl.cdiv(N, bb)
    Np = nb * bb                     # pad awkward N instead of letting bb collapse

    xf = x.astype(jnp.float32)
    if Np != N:
        xf = jnp.pad(xf, ((0, Np - N), (0, 0), (0, 0)))

    # Lane-pack batch into the position axis: (Np, C, L) -> (nb, C, bb*L),
    # lane index = s*L + t  (contiguous DMA rows, dense lanes).
    x_in = xf.reshape(nb, bb, C, L).transpose(0, 2, 1, 3).reshape(nb, C, bb * L)

    # Conv1 weights (O,I,K) -> (C, 3*O1), column = k*O1 + o  (output-axis tap fusion).
    w1_r = jnp.transpose(w1, (1, 2, 0)).reshape(C, 3 * O1).astype(jnp.float32)
    # Conv2 weights (O,I,K) -> (O1, 2*C), column = k*C + co  (both taps fused).
    w2_r = jnp.transpose(w2, (1, 2, 0)).reshape(O1, 2 * C).astype(jnp.float32)
    b1_r = b1.reshape(1, O1).astype(jnp.float32)
    b2_r = b2.reshape(1, C).astype(jnp.float32)

    def kernel(x_ref, w1_ref, b1_ref, w2_ref, b2_ref, out_ref):
        xr = x_ref[0]                                    # (C, bb*L), lane = s*L + t

        # ---- Conv1d(C -> 256, k=3, pad=1): one MXU matmul, input consumed
        # transposed (lhs contracts dim 0) so the lane-packed block needs no
        # in-kernel relayout.  (bf16 operands would ~3x MXU throughput at large
        # C/L; kept f32 for the tight self-test tolerance.)
        g = lax.dot_general(xr, w1_ref[...], (((0,), (0,)), ((), ())),
                            preferred_element_type=jnp.float32)      # (bb*L, 3*O1)
        g = g.reshape(bb, L, 3 * O1)
        h1 = g[:, :, O1:2 * O1]                          # center tap (k=1)
        if L > 1:
            z1o = jnp.zeros((bb, 1, O1), jnp.float32)
            # tap k=0 uses x[t-1]; tap k=2 uses x[t+1]  (pad=1 boundaries -> 0)
            h1 = h1 + jnp.concatenate([z1o, g[:, :L - 1, :O1]], axis=1)
            h1 = h1 + jnp.concatenate([g[:, 1:, 2 * O1:], z1o], axis=1)
        h1 = jnp.maximum(h1 + b1_ref[...].reshape(1, 1, O1), 0.0)

        # ---- Conv1d(256 -> C, k=2, pad=2): both taps in one matmul ----
        ab = jnp.dot(h1.reshape(bb * L, O1), w2_ref[...],
                     preferred_element_type=jnp.float32)             # (bb*L, 2C)
        ab = ab.reshape(bb, L, 2 * C)
        a3 = ab[:, :, :C]            # tap 0: A[j] contributes to y2[j+2]
        b3 = ab[:, :, C:]            # tap 1: B[j] contributes to y2[j+1]

        # y2[t] = A[t-2] + B[t-1] + b2 for t = 0..2*Lpool-1 (even length, no
        # L+3-row intermediate), then ReLU+MaxPool(2,2) as one aligned pair-max.
        def zs(n):
            return jnp.zeros((bb, n, C), jnp.float32)
        a_parts = [zs(2), a3] + ([zs(T - 2 - L)] if T - 2 - L else [])
        b_parts = [zs(1), b3, zs(T - 1 - L)]
        y = (jnp.concatenate(a_parts, axis=1) + jnp.concatenate(b_parts, axis=1)
             + b2_ref[...].reshape(1, 1, C))                          # (bb, T, C)
        y = y.reshape(bb, Lpool, 2, C)
        pooled = jnp.maximum(jnp.maximum(y[:, :, 0, :], y[:, :, 1, :]), 0.0)

        # ---- lane-dense store: (bb, Lpool, C) -> (C, bb*Lpool) via an exact
        # identity matmul on the MXU (rhs-transposed dot) ----
        flat = pooled.reshape(bb * Lpool, C)
        ridx = lax.broadcasted_iota(jnp.int32, (C, C), 0)
        cidx = lax.broadcasted_iota(jnp.int32, (C, C), 1)
        eye = (ridx == cidx).astype(jnp.float32)
        outt = lax.dot_general(eye, flat, (((1,), (1,)), ((), ())),
                               preferred_element_type=jnp.float32)   # (C, bb*Lpool)
        out_ref[...] = outt.reshape(1, C, bb * Lpool)

        # TODO(synk): nn.Dropout(0.5) is eval-mode identity here; training-mode
        # masking would use pltpu.prng_seed / pltpu.prng_random_bits.

    out = pl.pallas_call(
        kernel,
        out_shape=jax.ShapeDtypeStruct((nb, C, bb * Lpool), jnp.float32),
        grid_spec=pltpu.PrefetchScalarGridSpec(
            num_scalar_prefetch=0,
            grid=(nb,),
            in_specs=[
                pl.BlockSpec((1, C, bb * L), lambda i: (i, 0, 0)),
                # weights/biases: constant index maps -> kept resident; default
                # double-buffering is ~KB here (use pl.Buffered(1) for large C).
                pl.BlockSpec((C, 3 * O1), lambda i: (0, 0)),
                pl.BlockSpec((1, O1), lambda i: (0, 0)),
                pl.BlockSpec((O1, 2 * C), lambda i: (0, 0)),
                pl.BlockSpec((1, C), lambda i: (0, 0)),
            ],
            out_specs=pl.BlockSpec((1, C, bb * Lpool), lambda i: (i, 0, 0)),
        ),
        compiler_params=pltpu.CompilerParams(
            dimension_semantics=("parallel",),   # batch blocks are independent
            vmem_limit_bytes=vmem_limit),
    )(x_in, w1_r, b1_r, w2_r, b2_r)

    # (nb, C, bb*Lpool) -> (N, C, Lpool)
    out = out.reshape(nb, C, bb, Lpool).transpose(0, 2, 1, 3).reshape(Np, C, Lpool)
    return out[:N]


def _reference(x, w1, b1, w2, b2):
    """Pure-JAX reference matching the PyTorch forward (dropout in eval)."""
    dn = ("NCH", "OIH", "NCH")
    h = lax.conv_general_dilated(x, w1, (1,), [(1, 1)], dimension_numbers=dn)
    h = jax.nn.relu(h + b1[None, :, None])
    y = lax.conv_general_dilated(h, w2, (1,), [(2, 2)], dimension_numbers=dn)
    y = jax.nn.relu(y + b2[None, :, None])
    Lpool = y.shape[-1] // 2
    y = y[:, :, :2 * Lpool].reshape(y.shape[0], y.shape[1], Lpool, 2)
    return y.max(axis=-1)


if __name__ == "__main__":
    N, C, L = 2, 4, 16  # small shapes consistent with Conv1d(channels=C, ...)

    key = jax.random.PRNGKey(0)
    k1, k2, k3, k4, k5 = jax.random.split(key, 5)

    # Deterministic parameter init (PyTorch-style uniform(+-1/sqrt(fan_in))).
    bound1 = 1.0 / (C * 3) ** 0.5
    w1 = jax.random.uniform(k1, (256, C, 3), jnp.float32, -bound1, bound1)
    b1 = jax.random.uniform(k2, (256,), jnp.float32, -bound1, bound1)
    bound2 = 1.0 / (256 * 2) ** 0.5
    w2 = jax.random.uniform(k3, (C, 256, 2), jnp.float32, -bound2, bound2)
    b2 = jax.random.uniform(k4, (C,), jnp.float32, -bound2, bound2)

    x = jax.random.normal(k5, (N, C, L), jnp.float32)

    out = jax.jit(myconv1d_forward)(x, w1, b1, w2, b2)
    out = jax.block_until_ready(out)

    assert out.shape == (N, C, (L + 3) // 2), out.shape
    ref = _reference(x, w1, b1, w2, b2)
    assert jnp.allclose(out, ref, atol=1e-4, rtol=1e-4), "mismatch vs reference"

    print("KERNEL_OK")
</pallas_src>

<mosaic_0001>
module attributes {stable_mosaic.version = 11 : i64} {
  func.func @kernel(%arg0: i32, %arg1: memref<1x4x16xf32, #tpu.memory_space<vmem>>, %arg2: memref<4x768xf32, #tpu.memory_space<vmem>>, %arg3: memref<1x256xf32, #tpu.memory_space<vmem>>, %arg4: memref<256x8xf32, #tpu.memory_space<vmem>>, %arg5: memref<1x4xf32, #tpu.memory_space<vmem>>, %arg6: memref<1x4x9xf32, #tpu.memory_space<vmem>>) attributes {dimension_semantics = [#tpu.dimension_semantics<parallel>], iteration_bounds = array<i64: 2>, scalar_prefetch = 0 : i64, scratch_operands = 0 : i64, tpu.core_type = #tpu.core_type<tc>, window_params = [{transform_indices = @transform_0, window_bounds = array<i64: 1, 4, 16>}, {pipeline_mode = #tpu.pipeline_mode<synchronous>, transform_indices = @transform_1, window_bounds = array<i64: 4, 768>}, {pipeline_mode = #tpu.pipeline_mode<synchronous>, transform_indices = @transform_2, window_bounds = array<i64: 1, 256>}, {pipeline_mode = #tpu.pipeline_mode<synchronous>, transform_indices = @transform_3, window_bounds = array<i64: 256, 8>}, {pipeline_mode = #tpu.pipeline_mode<synchronous>, transform_indices = @transform_4, window_bounds = array<i64: 1, 4>}, {transform_indices = @transform_5, window_bounds = array<i64: 1, 4, 9>}]} {
    %c0 = arith.constant 0 : index
    %c0_0 = arith.constant 0 : index
    %c0_1 = arith.constant 0 : index
    %0 = vector.load %arg1[%c0, %c0_0, %c0_1] : memref<1x4x16xf32, #tpu.memory_space<vmem>>, vector<1x4x16xf32>
    %1 = vector.shape_cast %0 : vector<1x4x16xf32> to vector<4x16xf32>
    %c0_2 = arith.constant 0 : index
    %c0_3 = arith.constant 0 : index
    %2 = vector.load %arg2[%c0_2, %c0_3] : memref<4x768xf32, #tpu.memory_space<vmem>>, vector<4x768xf32>
    %cst = arith.constant dense<0.000000e+00> : vector<16x768xf32>
    %3 = tpu.matmul %1, %2, %cst {dimension_numbers = #tpu.dot_dimension_numbers<[0], [0], [1], [1], [0, 1, 1, 1], [], []>} : vector<4x16xf32>, vector<4x768xf32>, vector<16x768xf32> -> vector<16x768xf32>
    %4 = vector.shape_cast %3 : vector<16x768xf32> to vector<1x16x768xf32>
    %5 = vector.extract_strided_slice %4 {offsets = [0, 0, 256], sizes = [1, 16, 256], strides = [1, 1, 1]} : vector<1x16x768xf32> to vector<1x16x256xf32>
    %cst_4 = arith.constant 0.000000e+00 : f32
    %6 = vector.broadcast %cst_4 : f32 to vector<1x1x256xf32>
    %7 = vector.extract_strided_slice %4 {offsets = [0, 0, 0], sizes = [1, 15, 256], strides = [1, 1, 1]} : vector<1x16x768xf32> to vector<1x15x256xf32>
    %8 = tpu.concatenate %6, %7 in 1 : vector<1x1x256xf32>, vector<1x15x256xf32> -> vector<1x16x256xf32>
    %9 = arith.addf %5, %8 : vector<1x16x256xf32>
    %10 = vector.extract_strided_slice %4 {offsets = [0, 1, 512], sizes = [1, 15, 256], strides = [1, 1, 1]} : vector<1x16x768xf32> to vector<1x15x256xf32>
    %11 = tpu.concatenate %10, %6 in 1 : vector<1x15x256xf32>, vector<1x1x256xf32> -> vector<1x16x256xf32>
    %12 = arith.addf %9, %11 : vector<1x16x256xf32>
    %c0_5 = arith.constant 0 : index
    %c0_6 = arith.constant 0 : index
    %13 = vector.load %arg3[%c0_5, %c0_6] : memref<1x256xf32, #tpu.memory_space<vmem>>, vector<1x256xf32>
    %14 = vector.shape_cast %13 : vector<1x256xf32> to vector<1x1x256xf32>
    %15 = vector.broadcast %14 : vector<1x1x256xf32> to vector<1x16x256xf32>
    %16 = arith.addf %12, %15 : vector<1x16x256xf32>
    %cst_7 = arith.constant 0.000000e+00 : f32
    %17 = vector.broadcast %cst_7 : f32 to vector<1x16x256xf32>
    %18 = arith.maximumf %16, %17 : vector<1x16x256xf32>
    %19 = vector.shape_cast %18 : vector<1x16x256xf32> to vector<16x256xf32>
    %c0_8 = arith.constant 0 : index
    %c0_9 = arith.constant 0 : index
    %20 = vector.load %arg4[%c0_8, %c0_9] : memref<256x8xf32, #tpu.memory_space<vmem>>, vector<256x8xf32>
    %cst_10 = arith.constant dense<0.000000e+00> : vector<16x8xf32>
    %21 = tpu.matmul %19, %20, %cst_10 {dimension_numbers = #tpu.dot_dimension_numbers<[1], [0], [0], [1], [0, 0, 1, 1], [], []>} : vector<16x256xf32>, vector<256x8xf32>, vector<16x8xf32> -> vector<16x8xf32>
    %22 = vector.shape_cast %21 : vector<16x8xf32> to vector<1x16x8xf32>
    %23 = vector.extract_strided_slice %22 {offsets = [0, 0, 0], sizes = [1, 16, 4], strides = [1, 1, 1]} : vector<1x16x8xf32> to vector<1x16x4xf32>
    %24 = vector.extract_strided_slice %22 {offsets = [0, 0, 4], sizes = [1, 16, 4], strides = [1, 1, 1]} : vector<1x16x8xf32> to vector<1x16x4xf32>
    %cst_11 = arith.constant 0.000000e+00 : f32
    %25 = vector.broadcast %cst_11 : f32 to vector<1x2x4xf32>
    %cst_12 = arith.constant 0.000000e+00 : f32
    %26 = vector.broadcast %cst_12 : f32 to vector<1x1x4xf32>
    %cst_13 = arith.constant 0.000000e+00 : f32
    %27 = vector.broadcast %cst_13 : f32 to vector<1x1x4xf32>
    %28 = tpu.concatenate %25, %23 in 1 : vector<1x2x4xf32>, vector<1x16x4xf32> -> vector<1x18x4xf32>
    %29 = tpu.concatenate %26, %24, %27 in 1 : vector<1x1x4xf32>, vector<1x16x4xf32>, vector<1x1x4xf32> -> vector<1x18x4xf32>
    %30 = arith.addf %28, %29 : vector<1x18x4xf32>
    %c0_14 = arith.constant 0 : index
    %c0_15 = arith.constant 0 : index
    %31 = vector.load %arg5[%c0_14, %c0_15] : memref<1x4xf32, #tpu.memory_space<vmem>>, vector<1x4xf32>
    %32 = vector.shape_cast %31 : vector<1x4xf32> to vector<1x1x4xf32>
    %33 = vector.broadcast %32 : vector<1x1x4xf32> to vector<1x18x4xf32>
    %34 = arith.addf %30, %33 : vector<1x18x4xf32>
    %35 = vector.shape_cast %34 : vector<1x18x4xf32> to vector<1x9x2x4xf32>
    %36 = vector.extract_strided_slice %35 {offsets = [0, 0, 0, 0], sizes = [1, 9, 1, 4], strides = [1, 1, 1, 1]} : vector<1x9x2x4xf32> to vector<1x9x1x4xf32>
    %37 = vector.shape_cast %36 : vector<1x9x1x4xf32> to vector<1x9x4xf32>
    %38 = vector.extract_strided_slice %35 {offsets = [0, 0, 1, 0], sizes = [1, 9, 1, 4], strides = [1, 1, 1, 1]} : vector<1x9x2x4xf32> to vector<1x9x1x4xf32>
    %39 = vector.shape_cast %38 : vector<1x9x1x4xf32> to vector<1x9x4xf32>
    %40 = arith.maximumf %37, %39 : vector<1x9x4xf32>
    %cst_16 = arith.constant 0.000000e+00 : f32
    %41 = vector.broadcast %cst_16 : f32 to vector<1x9x4xf32>
    %42 = arith.maximumf %40, %41 : vector<1x9x4xf32>
    %43 = vector.shape_cast %42 : vector<1x9x4xf32> to vector<9x4xf32>
    %44 = tpu.iota {dimensions = array<i32: 0>} : vector<4x4xi32>
    %45 = tpu.iota {dimensions = array<i32: 1>} : vector<4x4xi32>
    %46 = arith.cmpi eq, %44, %45 : vector<4x4xi32>
    %47 = arith.extui %46 : vector<4x4xi1> to vector<4x4xi32>
    %48 = arith.sitofp %47 : vector<4x4xi32> to vector<4x4xf32>
    %cst_17 = arith.constant dense<0.000000e+00> : vector<4x9xf32>
    %49 = tpu.matmul %48, %43, %cst_17 {dimension_numbers = #tpu.dot_dimension_numbers<[1], [1], [0], [0], [0, 0, 1, 0], [], []>} : vector<4x4xf32>, vector<9x4xf32>, vector<4x9xf32> -> vector<4x9xf32>
    %50 = vector.shape_cast %49 : vector<4x9xf32> to vector<1x4x9xf32>
    %c0_18 = arith.constant 0 : index
    %c0_19 = arith.constant 0 : index
    %c0_20 = arith.constant 0 : index
    %51 = vector.load %arg6[%c0_18, %c0_19, %c0_20] : memref<1x4x9xf32, #tpu.memory_space<vmem>>, vector<1x4x9xf32>
    tpu.vector_store %arg6[%c0_18, %c0_19, %c0_20], %50 {strides = array<i32>} : memref<1x4x9xf32, #tpu.memory_space<vmem>>, vector<1x4x9xf32>,
    return
  }
  func.func @transform_0(%arg0: i32) -> (i32, i32, i32) {
    %c0_i32 = arith.constant 0 : i32
    %c0_i32_0 = arith.constant 0 : i32
    %c0_i32_1 = arith.constant 0 : i32
    return %arg0, %c0_i32, %c0_i32_0 : i32, i32, i32
  }
  func.func @transform_1(%arg0: i32) -> (i32, i32) {
    %c0_i32 = arith.constant 0 : i32
    %c0_i32_0 = arith.constant 0 : i32
    %c0_i32_1 = arith.constant 0 : i32
    return %c0_i32, %c0_i32_0 : i32, i32
  }
  func.func @transform_2(%arg0: i32) -> (i32, i32) {
    %c0_i32 = arith.constant 0 : i32
    %c0_i32_0 = arith.constant 0 : i32
    %c0_i32_1 = arith.constant 0 : i32
    return %c0_i32, %c0_i32_0 : i32, i32
  }
  func.func @transform_3(%arg0: i32) -> (i32, i32) {
    %c0_i32 = arith.constant 0 : i32
    %c0_i32_0 = arith.constant 0 : i32
    %c0_i32_1 = arith.constant 0 : i32
    return %c0_i32, %c0_i32_0 : i32, i32
  }
  func.func @transform_4(%arg0: i32) -> (i32, i32) {
    %c0_i32 = arith.constant 0 : i32
    %c0_i32_0 = arith.constant 0 : i32
    %c0_i32_1 = arith.constant 0 : i32
    return %c0_i32, %c0_i32_0 : i32, i32
  }
  func.func @transform_5(%arg0: i32) -> (i32, i32, i32) {
    %c0_i32 = arith.constant 0 : i32
    %c0_i32_0 = arith.constant 0 : i32
    %c0_i32_1 = arith.constant 0 : i32
    return %arg0, %c0_i32, %c0_i32_0 : i32, i32, i32
  }
}

</mosaic_0001>

<llo_original>
// kernel: myconv1d_forward.1
$region0: #{myconv1d_forward.1}
  #allocation0 [shape = 'u32[]', space=smem, size = 0x4, offset = 0x4, fixed_abs, tag = 'smem constant byte address 0x4 - core index']
  #allocation1 [shape = 'u32[72,128]{1,0:T(1,128)}', space=vmem, size = 0x9000, scoped, tag = 'internal scratch']
  %s0 = inlined_call_operand.vmem [shape: f32[2,4,16], index: 0, kind: input, shape index: {}]
  %s1 = inlined_call_operand.vmem [shape: f32[4,768], index: 1, kind: input, shape index: {}]
  %s2 = inlined_call_operand.vmem [shape: f32[1,256], index: 2, kind: input, shape index: {}]
  %s3 = inlined_call_operand.vmem [shape: f32[256,8], index: 3, kind: input, shape index: {}]
  %s4 = inlined_call_operand.vmem [shape: f32[1,4], index: 4, kind: input, shape index: {}]
  %s5 = inlined_call_operand.hbm [shape: f32[2,4,9], index: 5, kind: output, shape index: {}]
  %s6 = sld [smem:[#allocation0]]
  $region53: #{myconv1d_forward.1} parent=0
    _
  %s8 = ssub.s32 1, %s6
  %s9 = scalar_select 0, %s8, %s6
  $region1: #{myconv1d_forward.1} parent=0
    #allocation2 [shape = 'u8[4096]{0}', space=vmem, size = 0x1000, scoped, tag = 'output window, operand 0']
    #allocation3 [shape = 's32[2]{0}', space=sflag, size = 0x8, scoped, tag = 'scoped memory for myconv1d_forward.1']
    %10 = vsyncpa [#allocation3], 0
    %s11 = scalar_lea.sflag [#allocation3], 1
    %12 = vsyncpa %s11, 0
    loop: start=0, step=1, limit=4
    $region2: #{myconv1d_forward.1} parent=1 // loop_pre_header
      _
    $region3: #{myconv1d_forward.1} parent=1 // loop_header
      %s14 = sphi 0, %s18
      %p15 = scmp.ge.s32.totalorder %s14, 4
      %s24 = sphi 0, %s26
      %s27 = sphi 0, %s24
      %s28 = sphi 0, %s27
      %s44 = sphi 0, %s28
      %s48 = sphi 0, %s48
      %s50 = sphi 0, %s48
      %s51 = sphi 0, %s50
      %s65 = sphi 0, %s51
      %s69 = sphi 0, %s69
      %s71 = sphi 0, %s69
      %s72 = sphi 0, %s71
      %s86 = sphi 0, %s72
      %s90 = sphi 0, %s90
      %s92 = sphi 0, %s90
      %s93 = sphi 0, %s92
      %s107 = sphi 0, %s93
      %s111 = sphi 0, %s111
      %s113 = sphi 0, %s111
      %s114 = sphi 0, %s113
      %s128 = sphi 0, %s114
      %s134 = sphi 0, %s136
      %s137 = sphi 0, %s134
      %s138 = sphi 0, %s137
      %s154 = sphi 0, %s138
    $region4: #{myconv1d_forward.1} parent=1 // loop_header_branch
      %17 = sbr.rel (%p15) target = $region8
    $region5: #{myconv1d_forward.1} parent=1 // loop_body
      %s19 = ssub.s32 %s14, 1
      %s20 = ssub.s32 %s14, 2
      %s21 = sadd.s32 %s14, 1
      %s22 = ssub.s32 %s14, %s21
      %p23 = scmp.eq.s32.totalorder %s22, 0
      %s25 = sadd.s32 %s24, 1
      %s26 = scalar_select %p23, %s24, %s25
      %p29 = pneg %p23
      %p30 = scmp.eq.s32.totalorder %s14, 1
      %p31 = por %p29, %p30
      %p32 = scmp.ne.s32.totalorder %s24, %s27
      %p33 = scmp.eq.s32.totalorder %s14, 0
      %p34 = por %p32, %p33
      %p35 = scmp.ne.s32.totalorder %s24, %s27
      %p36 = scmp.eq.s32.totalorder %s19, 1
      %p37 = por %p35, %p36
      %p38 = scmp.ne.s32.totalorder %s27, %s28
      %p39 = scmp.eq.s32.totalorder %s19, 0
      %p40 = por %p38, %p39
      %p41 = scmp.ne.s32.totalorder %s27, %s28
      %p42 = scmp.eq.s32.totalorder %s20, 1
      %p43 = por %p41, %p42
      %p45 = scmp.ne.s32.totalorder %s28, %s44
      %p46 = scmp.eq.s32.totalorder %s20, 0
      %p47 = por %p45, %p46
      %s49 = sadd.s32 %s48, 1
      %p52 = scmp.eq.s32.totalorder %s14, 1
      %p53 = scmp.ne.s32.totalorder %s48, %s50
      %p54 = scmp.eq.s32.totalorder %s14, 0
      %p55 = por %p53, %p54
      %p56 = scmp.ne.s32.totalorder %s48, %s50
      %p57 = scmp.eq.s32.totalorder %s19, 1
      %p58 = por %p56, %p57
      %p59 = scmp.ne.s32.totalorder %s50, %s51
      %p60 = scmp.eq.s32.totalorder %s19, 0
      %p61 = por %p59, %p60
      %p62 = scmp.ne.s32.totalorder %s50, %s51
      %p63 = scmp.eq.s32.totalorder %s20, 1
      %p64 = por %p62, %p63
      %p66 = scmp.ne.s32.totalorder %s51, %s65
      %p67 = scmp.eq.s32.totalorder %s20, 0
      %p68 = por %p66, %p67
      %s70 = sadd.s32 %s69, 1
      %p73 = scmp.eq.s32.totalorder %s14, 1
      %p74 = scmp.ne.s32.totalorder %s69, %s71
      %p75 = scmp.eq.s32.totalorder %s14, 0
      %p76 = por %p74, %p75
      %p77 = scmp.ne.s32.totalorder %s69, %s71
      %p78 = scmp.eq.s32.totalorder %s19, 1
      %p79 = por %p77, %p78
      %p80 = scmp.ne.s32.totalorder %s71, %s72
      %p81 = scmp.eq.s32.totalorder %s19, 0
      %p82 = por %p80, %p81
      %p83 = scmp.ne.s32.totalorder %s71, %s72
      %p84 = scmp.eq.s32.totalorder %s20, 1
      %p85 = por %p83, %p84
      %p87 = scmp.ne.s32.totalorder %s72, %s86
      %p88 = scmp.eq.s32.totalorder %s20, 0
      %p89 = por %p87, %p88
      %s91 = sadd.s32 %s90, 1
      %p94 = scmp.eq.s32.totalorder %s14, 1
      %p95 = scmp.ne.s32.totalorder %s90, %s92
      %p96 = scmp.eq.s32.totalorder %s14, 0
      %p97 = por %p95, %p96
      %p98 = scmp.ne.s32.totalorder %s90, %s92
      %p99 = scmp.eq.s32.totalorder %s19, 1
      %p100 = por %p98, %p99
      %p101 = scmp.ne.s32.totalorder %s92, %s93
      %p102 = scmp.eq.s32.totalorder %s19, 0
      %p103 = por %p101, %p102
      %p104 = scmp.ne.s32.totalorder %s92, %s93
      %p105 = scmp.eq.s32.totalorder %s20, 1
      %p106 = por %p104, %p105
      %p108 = scmp.ne.s32.totalorder %s93, %s107
      %p109 = scmp.eq.s32.totalorder %s20, 0
      %p110 = por %p108, %p109
      %s112 = sadd.s32 %s111, 1
      %p115 = scmp.eq.s32.totalorder %s14, 1
      %p116 = scmp.ne.s32.totalorder %s111, %s113
      %p117 = scmp.eq.s32.totalorder %s14, 0
      %p118 = por %p116, %p117
      %p119 = scmp.ne.s32.totalorder %s111, %s113
      %p120 = scmp.eq.s32.totalorder %s19, 1
      %p121 = por %p119, %p120
      %p122 = scmp.ne.s32.totalorder %s113, %s114
      %p123 = scmp.eq.s32.totalorder %s19, 0
      %p124 = por %p122, %p123
      %p125 = scmp.ne.s32.totalorder %s113, %s114
      %p126 = scmp.eq.s32.totalorder %s20, 1
      %p127 = por %p125, %p126
      %p129 = scmp.ne.s32.totalorder %s114, %s128
      %p130 = scmp.eq.s32.totalorder %s20, 0
      %p131 = por %p129, %p130
      %s132 = ssub.s32 %s14, %s21
      %p133 = scmp.eq.s32.totalorder %s132, 0
      %s135 = sadd.s32 %s134, 1
      %s136 = scalar_select %p133, %s134, %s135
      %p139 = pneg %p133
      %p140 = scmp.eq.s32.totalorder %s14, 1
      %p141 = por %p139, %p140
      %p142 = scmp.ne.s32.totalorder %s134, %s137
      %p143 = scmp.eq.s32.totalorder %s14, 0
      %p144 = por %p142, %p143
      %p145 = scmp.ne.s32.totalorder %s134, %s137
      %p146 = scmp.eq.s32.totalorder %s19, 1
      %p147 = por %p145, %p146
      %p148 = scmp.ne.s32.totalorder %s137, %s138
      %p149 = scmp.eq.s32.totalorder %s19, 0
      %p150 = por %p148, %p149
      %p151 = scmp.ne.s32.totalorder %s137, %s138
      %p152 = scmp.eq.s32.totalorder %s20, 1
      %p153 = por %p151, %p152
      %p155 = scmp.ne.s32.totalorder %s138, %s154
      %p156 = scmp.eq.s32.totalorder %s20, 0
      %p157 = por %p155, %p156
      %p158 = scmp.le.s32.totalorder 1, %s14
      %p159 = scmp.lt.s32.totalorder %s14, 3
      %p160 = pnand %p158, %p159
      %p161 = pneg %p160
      // Predicated region
      $region9: #{myconv1d_forward.1} parent=5 // pred_check
        _
      $region10: #{myconv1d_forward.1} parent=5 // pred_check_branch
        %163 = sbr.rel (%p160) target = $region12
      $region11: #{myconv1d_forward.1} parent=5 // pred_region
        %s164 = ssub.s32 %s14, 1
        // Predicated region
        $region13: #{myconv1d_forward.1} parent=11 // pred_check
          %p165 = pneg %p61
        $region14: #{myconv1d_forward.1} parent=11 // pred_check_branch
          %167 = sbr.rel (%p165) target = $region16
        $region15: #{myconv1d_forward.1} parent=11 // pred_region
          _
        $region16: #{myconv1d_forward.1} parent=11 // pred_fallthru
          _
        // Predicated region
        $region17: #{myconv1d_forward.1} parent=11 // pred_check
          %p168 = pneg %p82
        $region18: #{myconv1d_forward.1} parent=11 // pred_check_branch
          %170 = sbr.rel (%p168) target = $region20
        $region19: #{myconv1d_forward.1} parent=11 // pred_region
          _
        $region20: #{myconv1d_forward.1} parent=11 // pred_fallthru
          _
        // Predicated region
        $region21: #{myconv1d_forward.1} parent=11 // pred_check
          %p171 = pneg %p103
        $region22: #{myconv1d_forward.1} parent=11 // pred_check_branch
          %173 = sbr.rel (%p171) target = $region24
        $region23: #{myconv1d_forward.1} parent=11 // pred_region
          _
        $region24: #{myconv1d_forward.1} parent=11 // pred_fallthru
          _
        // Predicated region
        $region25: #{myconv1d_forward.1} parent=11 // pred_check
          %p174 = pneg %p124
        $region26: #{myconv1d_forward.1} parent=11 // pred_check_branch
          %176 = sbr.rel (%p174) target = $region28
        $region27: #{myconv1d_forward.1} parent=11 // pred_region
          _
        $region28: #{myconv1d_forward.1} parent=11 // pred_fallthru
          _
      $region12: #{myconv1d_forward.1} parent=5 // pred_fallthru
        _
      %p177 = scmp.lt.s32.totalorder %s14, 2
      // Predicated region
      $region29: #{myconv1d_forward.1} parent=5 // pred_check
        %p178 = pneg %p177
      $region30: #{myconv1d_forward.1} parent=5 // pred_check_branch
        %180 = sbr.rel (%p178) target = $region32
      $region31: #{myconv1d_forward.1} parent=5 // pred_region
        // Predicated region
        $region33: #{myconv1d_forward.1} parent=31 // pred_check
          %p181 = pneg %p34
        $region34: #{myconv1d_forward.1} parent=31 // pred_check_branch
          %183 = sbr.rel (%p181) target = $region36
        $region35: #{myconv1d_forward.1} parent=31 // pred_region
          %p184 = scmp.lt.s32.totalorder %s14, 1
          %s185 = scalar_select %p184, %s14, 1
          %s186 = smul.addr %s185, 4
          %s187 = scalar_lea.vmem %s0, %s186
        $region36: #{myconv1d_forward.1} parent=31 // pred_fallthru
          _
      $region32: #{myconv1d_forward.1} parent=5 // pred_fallthru
        _
      %p188 = scmp.le.s32.totalorder 1, %s14
      %p189 = scmp.lt.s32.totalorder %s14, 3
      %p190 = pnand %p188, %p189
      %p191 = pneg %p190
      // Predicated region
      $region37: #{myconv1d_forward.1} parent=5 // pred_check
        _
      $region38: #{myconv1d_forward.1} parent=5 // pred_check_branch
        %193 = sbr.rel (%p190) target = $region40
      $region39: #{myconv1d_forward.1} parent=5 // pred_region
        %s194 = ssub.s32 %s14, 1
        %p195 = scmp.lt.s32.totalorder %s19, 1
        %s196 = scalar_select %p195, %s19, 1
        %s197 = smul.addr %s196, 4
        %s198 = scalar_lea.vmem %s0, %s197
        %p199 = pneg %p40
        %p200 = pneg %p37
        %p201 = pneg %p61
        %p202 = pneg %p58
        %p203 = pneg %p82
        %p204 = pneg %p79
        %p205 = pneg %p103
        %p206 = pneg %p100
        %p207 = pneg %p124
        %p208 = pneg %p121
        %p209 = pneg %p150
        %p210 = pneg %p147
        %s211 = sand.u32 %s137, 1
        %s212 = scalar_lea.sflag [#allocation3], %s211
        %s213 = sand.u32 %s137, 1
        %s214 = smul.addr %s213, 4
        %s215 = scalar_lea.vmem [#allocation2], %s214
        %p216 = scmp.lt.s32.totalorder %s19, 1
        %s217 = scalar_select %p216, %s19, 1
        %s218 = smul.addr %s217, 4
        %s219 = scalar_lea.vmem %s0, %s218
        %v220 = vld [vmem:[%s219] sm:$0xf]
        %v221 = vld [vmem:[%s1] sm:$0xff]
        %v222 = vld [vmem:[%s1 + $0x8] sm:$0xff]
        %v223 = vld [vmem:[%s1 + $0x10] sm:$0xff]
        %224 = vxpose.xlu0.b32.start [1/16] %v220, 128
        %225 = vxpose.xlu0.b32.cont [2/16] 0.0, 128
        %226 = vxpose.xlu0.b32.cont [3/16] 0.0, 128
        %227 = vxpose.xlu0.b32.cont [4/16] 0.0, 128
        %228 = vxpose.xlu0.b32.cont [5/16] 0.0, 128
        %229 = vxpose.xlu0.b32.cont [6/16] 0.0, 128
        %230 = vxpose.xlu0.b32.cont [7/16] 0.0, 128
        %231 = vxpose.xlu0.b32.cont [8/16] 0.0, 128
        %232 = vxpose.xlu0.b32.cont [9/16] 0.0, 128
        %233 = vxpose.xlu0.b32.cont [10/16] 0.0, 128
        %234 = vxpose.xlu0.b32.cont [11/16] 0.0, 128
        %235 = vxpose.xlu0.b32.cont [12/16] 0.0, 128
        %236 = vxpose.xlu0.b32.cont [13/16] 0.0, 128
        %237 = vxpose.xlu0.b32.cont [14/16] 0.0, 128
        %238 = vxpose.xlu0.b32.cont [15/16] 0.0, 128
        %239 = vxpose.xlu0.b32.end [16/16] 0.0, 128
        %v240 = vpop.trf.xlu0
        %v241 = vpop.trf.xlu0
        %v242 = vpop.trf.xlu0
        %v243 = vpop.trf.xlu0
        %v244 = vpop.trf.xlu0
        %v245 = vpop.trf.xlu0
        %v246 = vpop.trf.xlu0
        %v247 = vpop.trf.xlu0
        %v248 = vpop.trf.xlu0
        %v249 = vpop.trf.xlu0
        %v250 = vpop.trf.xlu0
        %v251 = vpop.trf.xlu0
        %v252 = vpop.trf.xlu0
        %v253 = vpop.trf.xlu0
        %v254 = vpop.trf.xlu0
        %v255 = vpop.trf.xlu0
        %259 = vst [vmem:[#allocation1] ss:$2 sm:$0xff] %v221
        %s260 = scalar_lea.vmem [#allocation1], 16
        %261 = vst [vmem:[%s260] ss:$2 sm:$0xff] %v222
        %s262 = scalar_lea.vmem [#allocation1], 32
        %263 = vst [vmem:[%s262] ss:$2 sm:$0xff] %v223
        %v264 = vld.sshfl [vmem:[#allocation1] sm:$0xff pattern:$0x75316420]
        %v265 = vld.sshfl [vmem:[#allocation1 + $0x8] sm:$0xff pattern:$0x75316420]
        %v266 = vld.sshfl [vmem:[#allocation1 + $0x10] sm:$0xff pattern:$0x75316420]
        %v267 = vld.sshfl [vmem:[#allocation1 + $0x18] sm:$0xff pattern:$0x75316420]
        %v268 = vld.sshfl [vmem:[#allocation1 + $0x20] sm:$0xff pattern:$0x75316420]
        %v269 = vld.sshfl [vmem:[#allocation1 + $0x28] sm:$0xff pattern:$0x75316420]
        %vm270 = vcmask 31744
        %v272 = vsel %vm270, %v240, 0
        %v275 = vsel %vm270, %v241, 0
        %vm277 = vcmask 1043456
        %v278 = vsel %vm277, %v264, 0
        %v280 = vsel %vm277, %v265, 0
        %v282 = vsel %vm277, %v266, 0
        %v284 = vsel %vm277, %v267, 0
        %v286 = vsel %vm277, %v268, 0
        %v288 = vsel %vm277, %v269, 0
        %290 = vmatpush.msra.mxu0 0.0
        %291 = vmatpush.msra.mxu0 0.0
        %292 = vmatpush.msra.mxu0 0.0
        %293 = vmatpush.msra.mxu0 0.0
        %294 = vmatpush.msra.mxu0 0.0
        %295 = vmatpush.msra.mxu0 0.0
        %296 = vmatpush.msra.mxu0 0.0
        %297 = vmatpush.msra.mxu0 0.0
        %298 = vmatpush.msra.mxu0 0.0
        %299 = vmatpush.msra.mxu0 0.0
        %300 = vmatpush.msra.mxu0 0.0
        %301 = vmatpush.msra.mxu0 0.0
        %302 = vmatpush.msra.mxu0 0.0
        %303 = vmatpush.msra.mxu0 0.0
        %304 = vmatpush.msra.mxu0 0.0
        %305 = vmatpush.msra.mxu0 %v278
        %306 = vmatmul.f32.gmra.mxu0 %v272
        %v307 = vpop.f32.mrf.mxu0
        %v308 = vadd.f32 0.0, %v307
        %309 = vmatmul.f32.gmra.mxu0 %v275
        %v310 = vpop.f32.mrf.mxu0
        %v311 = vadd.f32 0.0, %v310
        %312 = vdwg.mxu0
        %313 = vmatpush.msra.mxu0 0.0
        %314 = vmatpush.msra.mxu0 0.0
        %315 = vmatpush.msra.mxu0 0.0
        %316 = vmatpush.msra.mxu0 0.0
        %317 = vmatpush.msra.mxu0 0.0
        %318 = vmatpush.msra.mxu0 0.0
        %319 = vmatpush.msra.mxu0 0.0
        %320 = vmatpush.msra.mxu0 0.0
        %321 = vmatpush.msra.mxu0 0.0
        %322 = vmatpush.msra.mxu0 0.0
        %323 = vmatpush.msra.mxu0 0.0
        %324 = vmatpush.msra.mxu0 0.0
        %325 = vmatpush.msra.mxu0 0.0
        %326 = vmatpush.msra.mxu0 0.0
        %327 = vmatpush.msra.mxu0 0.0
        %328 = vmatpush.msra.mxu0 %v280
        %329 = vmatmul.f32.gmra.mxu0 %v272
        %v330 = vpop.f32.mrf.mxu0
        %v331 = vadd.f32 0.0, %v330
        %332 = vmatmul.f32.gmra.mxu0 %v275
        %v333 = vpop.f32.mrf.mxu0
        %v334 = vadd.f32 0.0, %v333
        %335 = vdwg.mxu0
        %336 = vmatpush.msra.mxu0 0.0
        %337 = vmatpush.msra.mxu0 0.0
        %338 = vmatpush.msra.mxu0 0.0
        %339 = vmatpush.msra.mxu0 0.0
        %340 = vmatpush.msra.mxu0 0.0
        %341 = vmatpush.msra.mxu0 0.0
        %342 = vmatpush.msra.mxu0 0.0
        %343 = vmatpush.msra.mxu0 0.0
        %344 = vmatpush.msra.mxu0 0.0
        %345 = vmatpush.msra.mxu0 0.0
        %346 = vmatpush.msra.mxu0 0.0
        %347 = vmatpush.msra.mxu0 0.0
        %348 = vmatpush.msra.mxu0 0.0
        %349 = vmatpush.msra.mxu0 0.0
        %350 = vmatpush.msra.mxu0 0.0
        %351 = vmatpush.msra.mxu0 %v282
        %352 = vmatmul.f32.gmra.mxu0 %v272
        %v353 = vpop.f32.mrf.mxu0
        %v354 = vadd.f32 0.0, %v353
        %355 = vmatmul.f32.gmra.mxu0 %v275
        %v356 = vpop.f32.mrf.mxu0
        %v357 = vadd.f32 0.0, %v356
        %358 = vdwg.mxu0
        %359 = vmatpush.msra.mxu0 0.0
        %360 = vmatpush.msra.mxu0 0.0
        %361 = vmatpush.msra.mxu0 0.0
        %362 = vmatpush.msra.mxu0 0.0
        %363 = vmatpush.msra.mxu0 0.0
        %364 = vmatpush.msra.mxu0 0.0
        %365 = vmatpush.msra.mxu0 0.0
        %366 = vmatpush.msra.mxu0 0.0
        %367 = vmatpush.msra.mxu0 0.0
        %368 = vmatpush.msra.mxu0 0.0
        %369 = vmatpush.msra.mxu0 0.0
        %370 = vmatpush.msra.mxu0 0.0
        %371 = vmatpush.msra.mxu0 0.0
        %372 = vmatpush.msra.mxu0 0.0
        %373 = vmatpush.msra.mxu0 0.0
        %374 = vmatpush.msra.mxu0 %v284
        %375 = vmatmul.f32.gmra.mxu0 %v272
        %v376 = vpop.f32.mrf.mxu0
        %v377 = vadd.f32 0.0, %v376
        %378 = vmatmul.f32.gmra.mxu0 %v275
        %v379 = vpop.f32.mrf.mxu0
        %v380 = vadd.f32 0.0, %v379
        %381 = vdwg.mxu0
        %382 = vmatpush.msra.mxu0 0.0
        %383 = vmatpush.msra.mxu0 0.0
        %384 = vmatpush.msra.mxu0 0.0
        %385 = vmatpush.msra.mxu0 0.0
        %386 = vmatpush.msra.mxu0 0.0
        %387 = vmatpush.msra.mxu0 0.0
        %388 = vmatpush.msra.mxu0 0.0
        %389 = vmatpush.msra.mxu0 0.0
        %390 = vmatpush.msra.mxu0 0.0
        %391 = vmatpush.msra.mxu0 0.0
        %392 = vmatpush.msra.mxu0 0.0
        %393 = vmatpush.msra.mxu0 0.0
        %394 = vmatpush.msra.mxu0 0.0
        %395 = vmatpush.msra.mxu0 0.0
        %396 = vmatpush.msra.mxu0 0.0
        %397 = vmatpush.msra.mxu0 %v286
        %398 = vmatmul.f32.gmra.mxu0 %v272
        %v399 = vpop.f32.mrf.mxu0
        %v400 = vadd.f32 0.0, %v399
        %401 = vmatmul.f32.gmra.mxu0 %v275
        %v402 = vpop.f32.mrf.mxu0
        %v403 = vadd.f32 0.0, %v402
        %404 = vdwg.mxu0
        %405 = vmatpush.msra.mxu0 0.0
        %406 = vmatpush.msra.mxu0 0.0
        %407 = vmatpush.msra.mxu0 0.0
        %408 = vmatpush.msra.mxu0 0.0
        %409 = vmatpush.msra.mxu0 0.0
        %410 = vmatpush.msra.mxu0 0.0
        %411 = vmatpush.msra.mxu0 0.0
        %412 = vmatpush.msra.mxu0 0.0
        %413 = vmatpush.msra.mxu0 0.0
        %414 = vmatpush.msra.mxu0 0.0
        %415 = vmatpush.msra.mxu0 0.0
        %416 = vmatpush.msra.mxu0 0.0
        %417 = vmatpush.msra.mxu0 0.0
        %418 = vmatpush.msra.mxu0 0.0
        %419 = vmatpush.msra.mxu0 0.0
        %420 = vmatpush.msra.mxu0 %v288
        %421 = vmatmul.f32.gmra.mxu0 %v272
        %v422 = vpop.f32.mrf.mxu0
        %v423 = vadd.f32 0.0, %v422
        %424 = vmatmul.f32.gmra.mxu0 %v275
        %v425 = vpop.f32.mrf.mxu0
        %v426 = vadd.f32 0.0, %v425
        %427 = vdwg.mxu0
        %vm432 = vcmask 1040384
        %v433 = vrot.slane %v308, 7
        %v434 = vrot.slane %v331, 7
        %v435 = vrot.slane %v311, 7
        %v436 = vsel %vm432, %v433, %v435
        %v437 = vrot.slane %v334, 7
        %v438 = vsel %vm432, %v434, %v437
        %v443 = vsel %vm432, 0.0, %v433
        %v444 = vsel %vm432, 0.0, %v434
        %v445 = vadd.f32 %v354, %v443
        %v446 = vadd.f32 %v377, %v444
        %v447 = vadd.f32 %v357, %v436
        %v448 = vadd.f32 %v380, %v438
        %vm453 = vcmask 1046528
        %v454 = vrot.slane %v400, 1
        %v455 = vrot.slane %v403, 1
        %v456 = vsel %vm453, %v454, %v455
        %v457 = vrot.slane %v423, 1
        %v458 = vrot.slane %v426, 1
        %v459 = vsel %vm453, %v457, %v458
        %v464 = vsel %vm453, %v455, 0.0
        %v465 = vsel %vm453, %v458, 0.0
        %v466 = vadd.f32 %v445, %v456
        %v467 = vadd.f32 %v446, %v459
        %v468 = vadd.f32 %v447, %v464
        %v469 = vadd.f32 %v448, %v465
        %v470 = vld [vmem:[%s2] sm:$0x3]
        %v472 = vperm.slane %v470, 0
        %v473 = vperm.slane %v470, 1
        %v476 = vadd.f32 %v466, %v472
        %v477 = vadd.f32 %v467, %v473
        %v478 = vadd.f32 %v468, %v472
        %v479 = vadd.f32 %v469, %v473
        %v480 = vmax.f32 %v476, 0.0
        %v481 = vmax.f32 %v477, 0.0
        %v482 = vmax.f32 %v478, 0.0
        %v483 = vmax.f32 %v479, 0.0
        %v484 = vld [vmem:[%s3] sm:$0xff]
        %v485 = vld [vmem:[%s3 + $0x8] sm:$0xff]
        %v486 = vld [vmem:[%s3 + $0x10] sm:$0xff]
        %v487 = vld [vmem:[%s3 + $0x18] sm:$0xff]
        %v488 = vld [vmem:[%s3 + $0x20] sm:$0xff]
        %v489 = vld [vmem:[%s3 + $0x28] sm:$0xff]
        %v490 = vld [vmem:[%s3 + $0x30] sm:$0xff]
        %v491 = vld [vmem:[%s3 + $0x38] sm:$0xff]
        %v492 = vld [vmem:[%s3 + $0x40] sm:$0xff]
        %v493 = vld [vmem:[%s3 + $0x48] sm:$0xff]
        %v494 = vld [vmem:[%s3 + $0x50] sm:$0xff]
        %v495 = vld [vmem:[%s3 + $0x58] sm:$0xff]
        %v496 = vld [vmem:[%s3 + $0x60] sm:$0xff]
        %v497 = vld [vmem:[%s3 + $0x68] sm:$0xff]
        %v498 = vld [vmem:[%s3 + $0x70] sm:$0xff]
        %v499 = vld [vmem:[%s3 + $0x78] sm:$0xff]
        %v500 = vld [vmem:[%s3 + $0x80] sm:$0xff]
        %v501 = vld [vmem:[%s3 + $0x88] sm:$0xff]
        %v502 = vld [vmem:[%s3 + $0x90] sm:$0xff]
        %v503 = vld [vmem:[%s3 + $0x98] sm:$0xff]
        %v504 = vld [vmem:[%s3 + $0xa0] sm:$0xff]
        %v505 = vld [vmem:[%s3 + $0xa8] sm:$0xff]
        %v506 = vld [vmem:[%s3 + $0xb0] sm:$0xff]
        %v507 = vld [vmem:[%s3 + $0xb8] sm:$0xff]
        %v508 = vld [vmem:[%s3 + $0xc0] sm:$0xff]
        %v509 = vld [vmem:[%s3 + $0xc8] sm:$0xff]
        %v510 = vld [vmem:[%s3 + $0xd0] sm:$0xff]
        %v511 = vld [vmem:[%s3 + $0xd8] sm:$0xff]
        %v512 = vld [vmem:[%s3 + $0xe0] sm:$0xff]
        %v513 = vld [vmem:[%s3 + $0xe8] sm:$0xff]
        %v514 = vld [vmem:[%s3 + $0xf0] sm:$0xff]
        %v515 = vld [vmem:[%s3 + $0xf8] sm:$0xff]
        %516 = vmatpush.msra.mxu0 %v499
        %517 = vmatpush.msra.mxu0 %v498
        %518 = vmatpush.msra.mxu0 %v497
        %519 = vmatpush.msra.mxu0 %v496
        %520 = vmatpush.msra.mxu0 %v495
        %521 = vmatpush.msra.mxu0 %v494
        %522 = vmatpush.msra.mxu0 %v493
        %523 = vmatpush.msra.mxu0 %v492
        %524 = vmatpush.msra.mxu0 %v491
        %525 = vmatpush.msra.mxu0 %v490
        %526 = vmatpush.msra.mxu0 %v489
        %527 = vmatpush.msra.mxu0 %v488
        %528 = vmatpush.msra.mxu0 %v487
        %529 = vmatpush.msra.mxu0 %v486
        %530 = vmatpush.msra.mxu0 %v485
        %531 = vmatpush.msra.mxu0 %v484
        %532 = vmatmul.f32.gmra.mxu0 %v480
        %v533 = vpop.f32.mrf.mxu0
        %v534 = vadd.f32 0.0, %v533
        %535 = vmatmul.f32.gmra.mxu0 %v482
        %v536 = vpop.f32.mrf.mxu0
        %v537 = vadd.f32 0.0, %v536
        %538 = vdwg.mxu0
        %539 = vmatpush.msra.mxu0 %v515
        %540 = vmatpush.msra.mxu0 %v514
        %541 = vmatpush.msra.mxu0 %v513
        %542 = vmatpush.msra.mxu0 %v512
        %543 = vmatpush.msra.mxu0 %v511
        %544 = vmatpush.msra.mxu0 %v510
        %545 = vmatpush.msra.mxu0 %v509
        %546 = vmatpush.msra.mxu0 %v508
        %547 = vmatpush.msra.mxu0 %v507
        %548 = vmatpush.msra.mxu0 %v506
        %549 = vmatpush.msra.mxu0 %v505
        %550 = vmatpush.msra.mxu0 %v504
        %551 = vmatpush.msra.mxu0 %v503
        %552 = vmatpush.msra.mxu0 %v502
        %553 = vmatpush.msra.mxu0 %v501
        %554 = vmatpush.msra.mxu0 %v500
        %555 = vmatmul.f32.gmra.mxu0 %v481
        %v556 = vpop.f32.mrf.mxu0
        %v557 = vadd.f32 %v534, %v556
        %558 = vmatmul.f32.gmra.mxu0 %v483
        %v559 = vpop.f32.mrf.mxu0
        %v560 = vadd.f32 %v537, %v559
        %561 = vdwg.mxu0
        %vm564 = vcmask 1041408
        %v565 = vrot.slane %v557, 6
        %v566 = vrot.slane %v560, 6
        %v567 = vsel %vm564, %v565, %v566
        %v571 = vsel %vm564, 0.0, %v565
        %v572 = vrot.slane %v557, 7
        %v573 = vrot.slane %v560, 7
        %v574 = vsel %vm432, %v572, %v573
        %575 = vrot.lane.b32.xlu0 %v572, 124
        %v576 = vpop.permute.xlu0 %575
        %577 = vrot.lane.b32.xlu0 %v574, 124
        %v578 = vpop.permute.xlu0 %577
        %579 = vrot.lane.b32.xlu0 %v573, 124
        %v580 = vpop.permute.xlu0 %579
        %v584 = vsel %vm432, 0.0, %v576
        %v585 = vsel %vm432, %v580, 0.0
        %v586 = vadd.f32 %v571, %v584
        %v587 = vadd.f32 %v567, %v578
        %v588 = vadd.f32 %v566, %v585
        %v589 = vld [vmem:[%s4] sm:$0x1]
        %v591 = vperm.slane %v589, 0
        %v593 = vadd.f32 %v586, %v591
        %v594 = vadd.f32 %v587, %v591
        %v595 = vadd.f32 %v588, %v591
        %v599 = vrot.slane %v593, 2
        %v600 = vrot.slane %v593, 4
        %v601 = vrot.slane %v593, 6
        %v602 = vrot.slane %v594, 2
        %v603 = vrot.slane %v594, 4
        %v604 = vrot.slane %v594, 6
        %v611 = vrot.slane %v593, 7
        %v612 = vrot.slane %v611, 2
        %v613 = vrot.slane %v599, 7
        %v614 = vrot.slane %v613, 2
        %v615 = vrot.slane %v600, 7
        %v616 = vrot.slane %v615, 2
        %v617 = vrot.slane %v601, 7
        %v618 = vrot.slane %v617, 2
        %v619 = vrot.slane %v594, 7
        %v620 = vrot.slane %v619, 2
        %v621 = vrot.slane %v602, 7
        %v622 = vrot.slane %v621, 2
        %v623 = vrot.slane %v603, 7
        %v624 = vrot.slane %v623, 2
        %v625 = vrot.slane %v604, 7
        %v626 = vrot.slane %v625, 2
        %v627 = vrot.slane %v595, 7
        %v628 = vrot.slane %v627, 2
        %v638 = vmax.f32 %v593, %v612
        %v639 = vmax.f32 %v599, %v614
        %v640 = vmax.f32 %v600, %v616
        %v641 = vmax.f32 %v601, %v618
        %v642 = vmax.f32 %v594, %v620
        %v643 = vmax.f32 %v602, %v622
        %v644 = vmax.f32 %v603, %v624
        %v645 = vmax.f32 %v604, %v626
        %v646 = vmax.f32 %v595, %v628
        %v647 = vmax.f32 %v638, 0.0
        %v648 = vmax.f32 %v639, 0.0
        %v649 = vmax.f32 %v640, 0.0
        %v650 = vmax.f32 %v641, 0.0
        %v651 = vmax.f32 %v642, 0.0
        %v652 = vmax.f32 %v643, 0.0
        %v653 = vmax.f32 %v644, 0.0
        %v654 = vmax.f32 %v645, 0.0
        %v655 = vmax.f32 %v646, 0.0
        %v656 = vlaneseq
        %v657 = vshrl.u32 %v656, 7
        %v658 = vlaneseq
        %v659 = vand.u32 %v658, 127
        %vm660 = vcmp.eq.s32.totalorder %v657, %v659
        %v661 = vsel %vm660, 1, 0
        %v662 = vcvt.s32.f32 %v661
        %v672 = vperm.slane %v647, 0
        %v673 = vperm.slane %v648, 0
        %v674 = vperm.slane %v649, 0
        %v675 = vperm.slane %v650, 0
        %v676 = vperm.slane %v651, 0
        %v677 = vperm.slane %v652, 0
        %v678 = vperm.slane %v653, 0
        %v679 = vperm.slane %v654, 0
        %v680 = vperm.slane %v655, 0
        %vm681 = vcmask 1041409
        %v682 = vsel %vm681, %v673, %v672
        %vm683 = vcmask 1042434
        %v684 = vsel %vm683, %v674, %v682
        %vm685 = vcmask 1043459
        %v686 = vsel %vm685, %v675, %v684
        %vm687 = vcmask 1044484
        %v688 = vsel %vm687, %v676, %v686
        %vm689 = vcmask 1045509
        %v690 = vsel %vm689, %v677, %v688
        %vm691 = vcmask 1046534
        %v692 = vsel %vm691, %v678, %v690
        %vm693 = vcmask 1047559
        %v694 = vsel %vm693, %v679, %v692
        %v696 = vsel %vm270, %v662, 0
        %v698 = vsel %vm270, %v694, 0
        %v700 = vsel %vm270, %v680, 0
        %702 = vmatpush.xpose.msra.mxu0 0.0
        %703 = vmatpush.xpose.msra.mxu0 0.0
        %704 = vmatpush.xpose.msra.mxu0 0.0
        %705 = vmatpush.xpose.msra.mxu0 0.0
        %706 = vmatpush.xpose.msra.mxu0 0.0
        %707 = vmatpush.xpose.msra.mxu0 0.0
        %708 = vmatpush.xpose.msra.mxu0 0.0
        %709 = vmatpush.xpose.msra.mxu0 0.0
        %710 = vmatpush.xpose.msra.mxu0 0.0
        %711 = vmatpush.xpose.msra.mxu0 0.0
        %712 = vmatpush.xpose.msra.mxu0 0.0
        %713 = vmatpush.xpose.msra.mxu0 0.0
        %714 = vmatpush.xpose.msra.mxu0 0.0
        %715 = vmatpush.xpose.msra.mxu0 0.0
        %716 = vmatpush.xpose.msra.mxu0 %v700
        %717 = vmatpush.xpose.msra.mxu0 %v698
        %718 = vmatmul.f32.gmra.mxu0 %v696
        %v719 = vpop.f32.mrf.mxu0
        %v720 = vadd.f32 0.0, %v719
        %721 = vdwg.mxu0
        %vm722 = vcmask 68608
        %723 = vst.msk [vmem:[%s215] sm:$0xf] %vm722, %v720
        %s724 = sand.u32 %s137, 1
        %s725 = scalar_lea.sflag [#allocation3], %s724
        %s726 = sand.u32 %s137, 1
        %s727 = smul.addr %s726, 4
        %s728 = scalar_lea.vmem [#allocation2], %s727
        // Predicated region
        $region41: #{myconv1d_forward.1} parent=39 // pred_check
          %p729 = pneg %p147
        $region42: #{myconv1d_forward.1} parent=39 // pred_check_branch
          %731 = sbr.rel (%p729) target = $region44
        $region43: #{myconv1d_forward.1} parent=39 // pred_region
          %733 = vsyncadd %s725, 0
          %s734 = smul.addr %s19, 4
          %s735 = scalar_lea.hbm %s5, %s734
          %s737 = sshll.u32 %s728, 4
          %s738 = int_to_ptr.vmem [resolvable:$true] %s737
          %s739 = sshll.u32 %s735, 4
          %s740 = int_to_ptr.hbm [resolvable:$true] %s739
          %742 = dma.vmem_to_hbm [thread:$0]  %s738, 64, %s740, %s725
        $region44: #{myconv1d_forward.1} parent=39 // pred_fallthru
          _
      $region40: #{myconv1d_forward.1} parent=5 // pred_fallthru
        _
      %p743 = scmp.le.s32.totalorder 2, %s14
      // Predicated region
      $region45: #{myconv1d_forward.1} parent=5 // pred_check
        %p744 = pneg %p743
      $region46: #{myconv1d_forward.1} parent=5 // pred_check_branch
        %746 = sbr.rel (%p744) target = $region48
      $region47: #{myconv1d_forward.1} parent=5 // pred_region
        %s747 = ssub.s32 %s14, 2
        // Predicated region
        $region49: #{myconv1d_forward.1} parent=47 // pred_check
          %p748 = pneg %p153
        $region50: #{myconv1d_forward.1} parent=47 // pred_check_branch
          %750 = sbr.rel (%p748) target = $region52
        $region51: #{myconv1d_forward.1} parent=47 // pred_region
          %s751 = sand.u32 %s138, 1
          %s752 = scalar_lea.sflag [#allocation3], %s751
          %s753 = sand.u32 %s138, 1
          %s754 = smul.addr %s753, 4
          %s755 = scalar_lea.vmem [#allocation2], %s754
          %757 = dma.done %s752, 64
        $region52: #{myconv1d_forward.1} parent=47 // pred_fallthru
          _
      $region48: #{myconv1d_forward.1} parent=5 // pred_fallthru
        _
    $region6: #{myconv1d_forward.1} parent=1 // loop_footer
      %s18 = sadd.s32 1, %s14
    $region7: #{myconv1d_forward.1} parent=1 // loop_footer_branch
      %13 = sbr.rel target = $region3
    $region8: #{myconv1d_forward.1} parent=1 // loop_exit
      _
    %758 = vsyncpa [#allocation3], 1
    %s759 = scalar_lea.sflag [#allocation3], 1
    %760 = vsyncpa %s759, 1

</llo_original>
